<compile_context>
chip_gen: v7x
topology: tpu7x:2x2x1
jax: 0.10.0
libtpu: 0.0.40
codegen_flags: <defaults>
</compile_context>

<pallas_src>
import functools

import jax
import jax.numpy as jnp
from jax import lax
from jax.experimental import pallas as pl
from jax.experimental.pallas import tpu as pltpu


def _neck_kernel(x_ref, w_ref, b_ref, og_ref, of_ref, *,
                 c_gaze: int, c_gaze_pad: int, c_face: int):
    """Fused dual-head 1x1 conv over a (TB, C, HW) tile.

    x_ref:  (TB, C, HW)        input feature tile
    w_ref:  (Ct_pad, C)        fused weight  (gaze rows, pad, face rows, pad)
    b_ref:  (Ct_pad, 1)        fused bias
    og_ref: (TB, Cg, HW)       gaze head output tile
    of_ref: (TB, Cf, HW)       face head output tile
    """
    tb, _, hw = x_ref.shape
    w = w_ref[...]
    # Hoist bias broadcast out of the per-batch loop (no CSE of broadcasts).
    b_bc = jnp.broadcast_to(b_ref[...], (w.shape[0], hw))

    def body(i, carry):
        # One fused MXU matmul per batch element; both heads accumulated in
        # the same pass, f32 accumulation, cast on store.
        y = jnp.dot(w, x_ref[i], preferred_element_type=jnp.float32) + b_bc
        og_ref[i] = y[:c_gaze, :].astype(og_ref.dtype)
        # Face rows start at an 8-aligned offset thanks to the weight padding.
        of_ref[i] = y[c_gaze_pad:c_gaze_pad + c_face, :].astype(of_ref.dtype)
        return carry

    if tb <= 8:
        # Small tiles: static unroll is fine and gives the scheduler full view.
        for i in range(tb):
            body(i, 0)
    else:
        # Large tiles: bounded live ranges, modest unroll for LLO scheduling.
        lax.fori_loop(0, tb, body, 0, unroll=4)


def _pad_rows_to_multiple(w, b, mult=8):
    """Zero-pad weight rows / bias so the row count is a multiple of `mult`."""
    rows = w.shape[0]
    pad = (-rows) % mult
    if pad:
        w = jnp.concatenate([w, jnp.zeros((pad, w.shape[1]), w.dtype)], axis=0)
        b = jnp.concatenate([b, jnp.zeros((pad,), b.dtype)], axis=0)
    return w, b, rows + pad


def _vmem_budget_bytes():
    """Per-TensorCore VMEM budget with headroom (64 MiB on v7x, 128 elsewhere)."""
    try:
        cap = pltpu.get_tpu_info().vmem_capacity_bytes
    except Exception:
        cap = 64 << 20  # conservative (v7x per-TC)
    return max(8 << 20, cap - (16 << 20))


def _pick_batch_tile(batch, per_b_bytes, weight_bytes, vmem_budget,
                     target_bytes=12 << 20):
    """Pick (tb, n_steps) so each grid step moves ~target_bytes of HBM traffic.

    Constraints:
      * double-buffered footprint (2 * tb * per_b + weights) fits vmem_budget
      * at least 2 grid steps, and prefer an even count, so both v7x
        TensorCores get balanced work under dimension_semantics=("parallel",)
    Batch is padded up to tb * n_steps by the caller.
    """
    per_b_bytes = max(per_b_bytes, 1)
    tb = max(1, target_bytes // per_b_bytes)
    vmem_cap = max(1, (vmem_budget - 2 * weight_bytes) // (2 * per_b_bytes))
    tb = max(1, min(tb, vmem_cap, batch))
    if batch >= 2:
        tb = min(tb, pl.cdiv(batch, 2))  # keep grid >= 2
    n_steps = pl.cdiv(batch, tb)
    if n_steps > 1 and n_steps % 2 == 1:
        n_steps += 1                     # prefer an even grid for v7x balance
        tb = pl.cdiv(batch, n_steps)
    return tb, n_steps


def base_neck_forward(x_nchw, w_gaze, b_gaze, w_face, b_face, *, io_dtype=None):
    """x_nchw: (B, C, H, W); w_*: (C_out, C); b_*: (C_out,)."""
    B, C, H, W = x_nchw.shape
    HW = H * W
    Cg = w_gaze.shape[0]
    Cf = w_face.shape[0]

    # NCHW -> (B, C, HW); HW is the lane dim (lane-dense when HW % 128 == 0).
    x = x_nchw.reshape(B, C, HW)
    if io_dtype is not None:
        x = x.astype(io_dtype)
        w_gaze, b_gaze = w_gaze.astype(io_dtype), b_gaze.astype(io_dtype)
        w_face, b_face = w_face.astype(io_dtype), b_face.astype(io_dtype)
    out_dtype = x.dtype

    # Fuse both heads with per-head rows padded to 8-sublane boundaries so the
    # in-kernel result slices stay aligned.
    w_g_p, b_g_p, Cg_pad = _pad_rows_to_multiple(w_gaze, b_gaze, 8)
    w_f_p, b_f_p, Cf_pad = _pad_rows_to_multiple(w_face, b_face, 8)
    Ct_pad = Cg_pad + Cf_pad
    w_fused = jnp.concatenate([w_g_p, w_f_p], axis=0)                   # (Ct_pad, C)
    b_fused = jnp.concatenate([b_g_p, b_f_p], axis=0).reshape(Ct_pad, 1)

    itemsize = jnp.dtype(out_dtype).itemsize
    per_b_bytes = (C + Cg + Cf) * HW * itemsize
    weight_bytes = Ct_pad * (C + 1) * jnp.dtype(w_fused.dtype).itemsize
    vmem_budget = _vmem_budget_bytes()

    tb, n_steps = _pick_batch_tile(B, per_b_bytes, weight_bytes, vmem_budget)
    B_pad = tb * n_steps
    if B_pad > B:
        x = jnp.pad(x, ((0, B_pad - B), (0, 0), (0, 0)))

    # Explicit VMEM limit covering double-buffered in/out blocks + weights.
    needed = 2 * tb * per_b_bytes + 2 * weight_bytes + (2 << 20)
    vmem_limit = int(min(vmem_budget, max(needed, 16 << 20)))

    kernel = functools.partial(
        _neck_kernel, c_gaze=Cg, c_gaze_pad=Cg_pad, c_face=Cf)

    out_gaze, out_face = pl.pallas_call(
        kernel,
        grid_spec=pltpu.PrefetchScalarGridSpec(
            num_scalar_prefetch=0,
            grid=(n_steps,),
            in_specs=[
                # Batched input tile: tb batch elements per grid step.
                pl.BlockSpec((tb, C, HW), lambda i: (i, 0, 0)),
                # Fused weight / bias: small, resident every step.
                pl.BlockSpec((Ct_pad, C), lambda i: (0, 0)),
                pl.BlockSpec((Ct_pad, 1), lambda i: (0, 0)),
            ],
            out_specs=[
                pl.BlockSpec((tb, Cg, HW), lambda i: (i, 0, 0)),
                pl.BlockSpec((tb, Cf, HW), lambda i: (i, 0, 0)),
            ],
        ),
        out_shape=(
            jax.ShapeDtypeStruct((B_pad, Cg, HW), out_dtype),
            jax.ShapeDtypeStruct((B_pad, Cf, HW), out_dtype),
        ),
        compiler_params=pltpu.CompilerParams(
            # Batch axis is independent -> shard across TensorCores on v7x;
            # a no-op on single-TC v5e/v6e.
            dimension_semantics=("parallel",),
            vmem_limit_bytes=vmem_limit,
        ),
    )(x, w_fused, b_fused)

    # Drop batch padding and flatten channel-major, matching NCHW .view(B, -1).
    return (out_gaze[:B].reshape(B, Cg * HW),
            out_face[:B].reshape(B, Cf * HW))


if __name__ == "__main__":
    key = jax.random.PRNGKey(0)
    B, C, H, W = 2, 4, 16, 16
    Cg, Cf = 8, 4  # synthetic reduced channel counts for gaze / face heads

    k_x, k_wg, k_bg, k_wf, k_bf = jax.random.split(key, 5)
    x = jax.random.normal(k_x, (B, C, H, W), dtype=jnp.float32)
    w_gaze = jax.random.normal(k_wg, (Cg, C), dtype=jnp.float32) * 0.1
    b_gaze = jax.random.normal(k_bg, (Cg,), dtype=jnp.float32) * 0.1
    w_face = jax.random.normal(k_wf, (Cf, C), dtype=jnp.float32) * 0.1
    b_face = jax.random.normal(k_bf, (Cf,), dtype=jnp.float32) * 0.1

    reduce_gaze, reduce_face = base_neck_forward(x, w_gaze, b_gaze, w_face, b_face)
    jax.block_until_ready((reduce_gaze, reduce_face))

    # Pure-JAX reference (1x1 conv == einsum over channels) for sanity check.
    ref_g = (
        jnp.einsum("oc,bchw->bohw", w_gaze, x) + b_gaze[None, :, None, None]
    ).reshape(B, -1)
    ref_f = (
        jnp.einsum("oc,bchw->bohw", w_face, x) + b_face[None, :, None, None]
    ).reshape(B, -1)
    assert reduce_gaze.shape == (B, Cg * H * W)
    assert reduce_face.shape == (B, Cf * H * W)
    assert jnp.allclose(reduce_gaze, ref_g, atol=1e-5)
    assert jnp.allclose(reduce_face, ref_f, atol=1e-5)

    print("KERNEL_OK")
</pallas_src>

<mosaic_0001>
module attributes {stable_mosaic.version = 11 : i64} {
  func.func @_neck_kernel(%arg0: i32, %arg1: memref<1x4x256xf32, #tpu.memory_space<vmem>>, %arg2: memref<16x4xf32, #tpu.memory_space<vmem>>, %arg3: memref<16x1xf32, #tpu.memory_space<vmem>>, %arg4: memref<1x8x256xf32, #tpu.memory_space<vmem>>, %arg5: memref<1x4x256xf32, #tpu.memory_space<vmem>>) attributes {dimension_semantics = [#tpu.dimension_semantics<parallel>], iteration_bounds = array<i64: 2>, scalar_prefetch = 0 : i64, scratch_operands = 0 : i64, tpu.core_type = #tpu.core_type<tc>, window_params = [{transform_indices = @transform_0, window_bounds = array<i64: 1, 4, 256>}, {pipeline_mode = #tpu.pipeline_mode<synchronous>, transform_indices = @transform_1, window_bounds = array<i64: 16, 4>}, {pipeline_mode = #tpu.pipeline_mode<synchronous>, transform_indices = @transform_2, window_bounds = array<i64: 16, 1>}, {transform_indices = @transform_3, window_bounds = array<i64: 1, 8, 256>}, {transform_indices = @transform_4, window_bounds = array<i64: 1, 4, 256>}]} {
    %c0 = arith.constant 0 : index
    %c0_0 = arith.constant 0 : index
    %0 = vector.load %arg2[%c0, %c0_0] : memref<16x4xf32, #tpu.memory_space<vmem>>, vector<16x4xf32>
    %c0_1 = arith.constant 0 : index
    %c0_2 = arith.constant 0 : index
    %1 = vector.load %arg3[%c0_1, %c0_2] : memref<16x1xf32, #tpu.memory_space<vmem>>, vector<16x1xf32>
    %2 = vector.shape_cast %1 : vector<16x1xf32> to vector<16x1xf32>
    %3 = vector.broadcast %2 : vector<16x1xf32> to vector<16x256xf32>
    %c0_3 = arith.constant 0 : index
    %c0_4 = arith.constant 0 : index
    %c0_5 = arith.constant 0 : index
    %4 = vector.load %arg1[%c0_3, %c0_4, %c0_5] : memref<1x4x256xf32, #tpu.memory_space<vmem>>, vector<1x4x256xf32>
    %5 = vector.shape_cast %4 : vector<1x4x256xf32> to vector<4x256xf32>
    %cst = arith.constant dense<0.000000e+00> : vector<16x256xf32>
    %6 = tpu.matmul %0, %5, %cst {dimension_numbers = #tpu.dot_dimension_numbers<[1], [0], [0], [1], [0, 0, 1, 1], [], []>} : vector<16x4xf32>, vector<4x256xf32>, vector<16x256xf32> -> vector<16x256xf32>
    %7 = arith.addf %6, %3 : vector<16x256xf32>
    %8 = vector.extract_strided_slice %7 {offsets = [0, 0], sizes = [8, 256], strides = [1, 1]} : vector<16x256xf32> to vector<8x256xf32>
    %c0_6 = arith.constant 0 : index
    %c0_7 = arith.constant 0 : index
    %c0_8 = arith.constant 0 : index
    %9 = vector.load %arg4[%c0_6, %c0_7, %c0_8] : memref<1x8x256xf32, #tpu.memory_space<vmem>>, vector<1x8x256xf32>
    %10 = vector.shape_cast %9 : vector<1x8x256xf32> to vector<8x256xf32>
    %11 = vector.shape_cast %8 : vector<8x256xf32> to vector<1x8x256xf32>
    tpu.vector_store %arg4[%c0_6, %c0_7, %c0_8], %11 {strides = array<i32>} : memref<1x8x256xf32, #tpu.memory_space<vmem>>, vector<1x8x256xf32>,
    %12 = vector.extract_strided_slice %7 {offsets = [8, 0], sizes = [4, 256], strides = [1, 1]} : vector<16x256xf32> to vector<4x256xf32>
    %c0_9 = arith.constant 0 : index
    %c0_10 = arith.constant 0 : index
    %c0_11 = arith.constant 0 : index
    %13 = vector.load %arg5[%c0_9, %c0_10, %c0_11] : memref<1x4x256xf32, #tpu.memory_space<vmem>>, vector<1x4x256xf32>
    %14 = vector.shape_cast %13 : vector<1x4x256xf32> to vector<4x256xf32>
    %15 = vector.shape_cast %12 : vector<4x256xf32> to vector<1x4x256xf32>
    tpu.vector_store %arg5[%c0_9, %c0_10, %c0_11], %15 {strides = array<i32>} : memref<1x4x256xf32, #tpu.memory_space<vmem>>, vector<1x4x256xf32>,
    return
  }
  func.func @transform_0(%arg0: i32) -> (i32, i32, i32) {
    %c0_i32 = arith.constant 0 : i32
    %c0_i32_0 = arith.constant 0 : i32
    %c0_i32_1 = arith.constant 0 : i32
    return %arg0, %c0_i32, %c0_i32_0 : i32, i32, i32
  }
  func.func @transform_1(%arg0: i32) -> (i32, i32) {
    %c0_i32 = arith.constant 0 : i32
    %c0_i32_0 = arith.constant 0 : i32
    %c0_i32_1 = arith.constant 0 : i32
    return %c0_i32, %c0_i32_0 : i32, i32
  }
  func.func @transform_2(%arg0: i32) -> (i32, i32) {
    %c0_i32 = arith.constant 0 : i32
    %c0_i32_0 = arith.constant 0 : i32
    %c0_i32_1 = arith.constant 0 : i32
    return %c0_i32, %c0_i32_0 : i32, i32
  }
  func.func @transform_3(%arg0: i32) -> (i32, i32, i32) {
    %c0_i32 = arith.constant 0 : i32
    %c0_i32_0 = arith.constant 0 : i32
    %c0_i32_1 = arith.constant 0 : i32
    return %arg0, %c0_i32, %c0_i32_0 : i32, i32, i32
  }
  func.func @transform_4(%arg0: i32) -> (i32, i32, i32) {
    %c0_i32 = arith.constant 0 : i32
    %c0_i32_0 = arith.constant 0 : i32
    %c0_i32_1 = arith.constant 0 : i32
    return %arg0, %c0_i32, %c0_i32_0 : i32, i32, i32
  }
}

</mosaic_0001>

<llo_original>
// kernel: tpu_custom_call.1
$region0: #{tpu_custom_call.1}
  #allocation0 [shape = 'u32[]', space=smem, size = 0x4, offset = 0x4, fixed_abs, tag = 'smem constant byte address 0x4 - core index']
  #allocation1 [shape = 'u32[144,128]{1,0:T(1,128)}', space=vmem, size = 0x12000, scoped, tag = 'internal scratch']
  %s0 = inlined_call_operand.vmem [shape: f32[2,4,256], index: 0, kind: input, shape index: {}]
  %s1 = inlined_call_operand.vmem [shape: f32[16,4], index: 1, kind: input, shape index: {}]
  %s2 = inlined_call_operand.vmem [shape: f32[16,1], index: 2, kind: input, shape index: {}]
  %s3 = inlined_call_operand.hbm [shape: f32[2,8,256], index: 3, kind: output, shape index: {0}]
  %s4 = inlined_call_operand.hbm [shape: f32[2,4,256], index: 4, kind: output, shape index: {1}]
  %5 = xla_tuple %s3, %s4
  %s6 = sld [smem:[#allocation0]]
  $region53: #{tpu_custom_call.1} parent=0
    _
  %s8 = ssub.s32 1, %s6
  %s9 = scalar_select 0, %s8, %s6
  $region1: #{tpu_custom_call.1} parent=0
    #allocation2 [shape = 'u8[16384]{0}', space=vmem, size = 0x4000, scoped, tag = 'output window, operand 0']
    #allocation3 [shape = 's32[2]{0}', space=sflag, size = 0x8, scoped, tag = 'scoped memory for tpu_custom_call.1']
    #allocation4 [shape = 'u8[8192]{0}', space=vmem, size = 0x2000, scoped, tag = 'output window, operand 1']
    #allocation5 [shape = 's32[2]{0}', space=sflag, size = 0x8, scoped, tag = 'scoped memory for tpu_custom_call.1']
    %10 = vsyncpa [#allocation3], 0
    %s11 = scalar_lea.sflag [#allocation3], 1
    %12 = vsyncpa %s11, 0
    %13 = vsyncpa [#allocation5], 0
    %s14 = scalar_lea.sflag [#allocation5], 1
    %15 = vsyncpa %s14, 0
    loop: start=0, step=1, limit=4
    $region2: #{tpu_custom_call.1} parent=1 // loop_pre_header
      _
    $region3: #{tpu_custom_call.1} parent=1 // loop_header
      %s17 = sphi 0, %s21
      %p18 = scmp.ge.s32.totalorder %s17, 4
      %s27 = sphi 0, %s29
      %s30 = sphi 0, %s27
      %s31 = sphi 0, %s30
      %s47 = sphi 0, %s31
      %s51 = sphi 0, %s51
      %s53 = sphi 0, %s51
      %s54 = sphi 0, %s53
      %s68 = sphi 0, %s54
      %s72 = sphi 0, %s72
      %s74 = sphi 0, %s72
      %s75 = sphi 0, %s74
      %s89 = sphi 0, %s75
      %s95 = sphi 0, %s97
      %s98 = sphi 0, %s95
      %s99 = sphi 0, %s98
      %s115 = sphi 0, %s99
      %s121 = sphi 0, %s123
      %s124 = sphi 0, %s121
      %s125 = sphi 0, %s124
      %s141 = sphi 0, %s125
    $region4: #{tpu_custom_call.1} parent=1 // loop_header_branch
      %20 = sbr.rel (%p18) target = $region8
    $region5: #{tpu_custom_call.1} parent=1 // loop_body
      %s22 = ssub.s32 %s17, 1
      %s23 = ssub.s32 %s17, 2
      %s24 = sadd.s32 %s17, 1
      %s25 = ssub.s32 %s17, %s24
      %p26 = scmp.eq.s32.totalorder %s25, 0
      %s28 = sadd.s32 %s27, 1
      %s29 = scalar_select %p26, %s27, %s28
      %p32 = pneg %p26
      %p33 = scmp.eq.s32.totalorder %s17, 1
      %p34 = por %p32, %p33
      %p35 = scmp.ne.s32.totalorder %s27, %s30
      %p36 = scmp.eq.s32.totalorder %s17, 0
      %p37 = por %p35, %p36
      %p38 = scmp.ne.s32.totalorder %s27, %s30
      %p39 = scmp.eq.s32.totalorder %s22, 1
      %p40 = por %p38, %p39
      %p41 = scmp.ne.s32.totalorder %s30, %s31
      %p42 = scmp.eq.s32.totalorder %s22, 0
      %p43 = por %p41, %p42
      %p44 = scmp.ne.s32.totalorder %s30, %s31
      %p45 = scmp.eq.s32.totalorder %s23, 1
      %p46 = por %p44, %p45
      %p48 = scmp.ne.s32.totalorder %s31, %s47
      %p49 = scmp.eq.s32.totalorder %s23, 0
      %p50 = por %p48, %p49
      %s52 = sadd.s32 %s51, 1
      %p55 = scmp.eq.s32.totalorder %s17, 1
      %p56 = scmp.ne.s32.totalorder %s51, %s53
      %p57 = scmp.eq.s32.totalorder %s17, 0
      %p58 = por %p56, %p57
      %p59 = scmp.ne.s32.totalorder %s51, %s53
      %p60 = scmp.eq.s32.totalorder %s22, 1
      %p61 = por %p59, %p60
      %p62 = scmp.ne.s32.totalorder %s53, %s54
      %p63 = scmp.eq.s32.totalorder %s22, 0
      %p64 = por %p62, %p63
      %p65 = scmp.ne.s32.totalorder %s53, %s54
      %p66 = scmp.eq.s32.totalorder %s23, 1
      %p67 = por %p65, %p66
      %p69 = scmp.ne.s32.totalorder %s54, %s68
      %p70 = scmp.eq.s32.totalorder %s23, 0
      %p71 = por %p69, %p70
      %s73 = sadd.s32 %s72, 1
      %p76 = scmp.eq.s32.totalorder %s17, 1
      %p77 = scmp.ne.s32.totalorder %s72, %s74
      %p78 = scmp.eq.s32.totalorder %s17, 0
      %p79 = por %p77, %p78
      %p80 = scmp.ne.s32.totalorder %s72, %s74
      %p81 = scmp.eq.s32.totalorder %s22, 1
      %p82 = por %p80, %p81
      %p83 = scmp.ne.s32.totalorder %s74, %s75
      %p84 = scmp.eq.s32.totalorder %s22, 0
      %p85 = por %p83, %p84
      %p86 = scmp.ne.s32.totalorder %s74, %s75
      %p87 = scmp.eq.s32.totalorder %s23, 1
      %p88 = por %p86, %p87
      %p90 = scmp.ne.s32.totalorder %s75, %s89
      %p91 = scmp.eq.s32.totalorder %s23, 0
      %p92 = por %p90, %p91
      %s93 = ssub.s32 %s17, %s24
      %p94 = scmp.eq.s32.totalorder %s93, 0
      %s96 = sadd.s32 %s95, 1
      %s97 = scalar_select %p94, %s95, %s96
      %p100 = pneg %p94
      %p101 = scmp.eq.s32.totalorder %s17, 1
      %p102 = por %p100, %p101
      %p103 = scmp.ne.s32.totalorder %s95, %s98
      %p104 = scmp.eq.s32.totalorder %s17, 0
      %p105 = por %p103, %p104
      %p106 = scmp.ne.s32.totalorder %s95, %s98
      %p107 = scmp.eq.s32.totalorder %s22, 1
      %p108 = por %p106, %p107
      %p109 = scmp.ne.s32.totalorder %s98, %s99
      %p110 = scmp.eq.s32.totalorder %s22, 0
      %p111 = por %p109, %p110
      %p112 = scmp.ne.s32.totalorder %s98, %s99
      %p113 = scmp.eq.s32.totalorder %s23, 1
      %p114 = por %p112, %p113
      %p116 = scmp.ne.s32.totalorder %s99, %s115
      %p117 = scmp.eq.s32.totalorder %s23, 0
      %p118 = por %p116, %p117
      %s119 = ssub.s32 %s17, %s24
      %p120 = scmp.eq.s32.totalorder %s119, 0
      %s122 = sadd.s32 %s121, 1
      %s123 = scalar_select %p120, %s121, %s122
      %p126 = pneg %p120
      %p127 = scmp.eq.s32.totalorder %s17, 1
      %p128 = por %p126, %p127
      %p129 = scmp.ne.s32.totalorder %s121, %s124
      %p130 = scmp.eq.s32.totalorder %s17, 0
      %p131 = por %p129, %p130
      %p132 = scmp.ne.s32.totalorder %s121, %s124
      %p133 = scmp.eq.s32.totalorder %s22, 1
      %p134 = por %p132, %p133
      %p135 = scmp.ne.s32.totalorder %s124, %s125
      %p136 = scmp.eq.s32.totalorder %s22, 0
      %p137 = por %p135, %p136
      %p138 = scmp.ne.s32.totalorder %s124, %s125
      %p139 = scmp.eq.s32.totalorder %s23, 1
      %p140 = por %p138, %p139
      %p142 = scmp.ne.s32.totalorder %s125, %s141
      %p143 = scmp.eq.s32.totalorder %s23, 0
      %p144 = por %p142, %p143
      %p145 = scmp.le.s32.totalorder 1, %s17
      %p146 = scmp.lt.s32.totalorder %s17, 3
      %p147 = pnand %p145, %p146
      %p148 = pneg %p147
      // Predicated region
      $region9: #{tpu_custom_call.1} parent=5 // pred_check
        _
      $region10: #{tpu_custom_call.1} parent=5 // pred_check_branch
        %150 = sbr.rel (%p147) target = $region12
      $region11: #{tpu_custom_call.1} parent=5 // pred_region
        %s151 = ssub.s32 %s17, 1
        // Predicated region
        $region13: #{tpu_custom_call.1} parent=11 // pred_check
          %p152 = pneg %p64
        $region14: #{tpu_custom_call.1} parent=11 // pred_check_branch
          %154 = sbr.rel (%p152) target = $region16
        $region15: #{tpu_custom_call.1} parent=11 // pred_region
          _
        $region16: #{tpu_custom_call.1} parent=11 // pred_fallthru
          _
        // Predicated region
        $region17: #{tpu_custom_call.1} parent=11 // pred_check
          %p155 = pneg %p85
        $region18: #{tpu_custom_call.1} parent=11 // pred_check_branch
          %157 = sbr.rel (%p155) target = $region20
        $region19: #{tpu_custom_call.1} parent=11 // pred_region
          _
        $region20: #{tpu_custom_call.1} parent=11 // pred_fallthru
          _
      $region12: #{tpu_custom_call.1} parent=5 // pred_fallthru
        _
      %p158 = scmp.lt.s32.totalorder %s17, 2
      // Predicated region
      $region21: #{tpu_custom_call.1} parent=5 // pred_check
        %p159 = pneg %p158
      $region22: #{tpu_custom_call.1} parent=5 // pred_check_branch
        %161 = sbr.rel (%p159) target = $region24
      $region23: #{tpu_custom_call.1} parent=5 // pred_region
        // Predicated region
        $region25: #{tpu_custom_call.1} parent=23 // pred_check
          %p162 = pneg %p37
        $region26: #{tpu_custom_call.1} parent=23 // pred_check_branch
          %164 = sbr.rel (%p162) target = $region28
        $region27: #{tpu_custom_call.1} parent=23 // pred_region
          %p165 = scmp.lt.s32.totalorder %s17, 1
          %s166 = scalar_select %p165, %s17, 1
          %s167 = smul.addr %s166, 2
          %s168 = smul.addr %s167, 4
          %s169 = scalar_lea.vmem %s0, %s168
        $region28: #{tpu_custom_call.1} parent=23 // pred_fallthru
          _
      $region24: #{tpu_custom_call.1} parent=5 // pred_fallthru
        _
      %p170 = scmp.le.s32.totalorder 1, %s17
      %p171 = scmp.lt.s32.totalorder %s17, 3
      %p172 = pnand %p170, %p171
      %p173 = pneg %p172
      // Predicated region
      $region29: #{tpu_custom_call.1} parent=5 // pred_check
        _
      $region30: #{tpu_custom_call.1} parent=5 // pred_check_branch
        %175 = sbr.rel (%p172) target = $region32
      $region31: #{tpu_custom_call.1} parent=5 // pred_region
        %s176 = ssub.s32 %s17, 1
        %p177 = scmp.lt.s32.totalorder %s22, 1
        %s178 = scalar_select %p177, %s22, 1
        %s179 = smul.addr %s178, 2
        %s180 = smul.addr %s179, 4
        %s181 = scalar_lea.vmem %s0, %s180
        %p182 = pneg %p43
        %p183 = pneg %p40
        %p184 = pneg %p64
        %p185 = pneg %p61
        %p186 = pneg %p85
        %p187 = pneg %p82
        %p188 = pneg %p111
        %p189 = pneg %p108
        %s190 = sand.u32 %s98, 1
        %s191 = scalar_lea.sflag [#allocation3], %s190
        %s192 = sand.u32 %s98, 1
        %s193 = smul.addr %s192, 16
        %s194 = scalar_lea.vmem [#allocation2], %s193
        %p195 = pneg %p137
        %p196 = pneg %p134
        %s197 = sand.u32 %s124, 1
        %s198 = scalar_lea.sflag [#allocation5], %s197
        %s199 = sand.u32 %s124, 1
        %s200 = smul.addr %s199, 8
        %s201 = scalar_lea.vmem [#allocation4], %s200
        %p202 = scmp.lt.s32.totalorder %s22, 1
        %s203 = scalar_select %p202, %s22, 1
        %s204 = smul.addr %s203, 2
        %s205 = smul.addr %s204, 4
        %s206 = scalar_lea.vmem %s0, %s205
        %v207 = vld [vmem:[%s1] sm:$0xff]
        %v208 = vld [vmem:[%s1 + $0x8] sm:$0xff]
        %v209 = vld [vmem:[%s2] sm:$0xff]
        %v210 = vld [vmem:[%s2 + $0x8] sm:$0xff]
        %212 = vset.pattern.permute.xlu0 0
        %213 = vperm.xlu0 %212, %v209
        %v214 = vpop.permute.xlu0 %213
        %217 = vset.pattern.permute.xlu0 0
        %218 = vperm.xlu0 %217, %v210
        %v219 = vpop.permute.xlu0 %218
        %v221 = vld [vmem:[%s206] sm:$0xff]
        %v223 = vcombine.high %v221, %v221
        %vm224 = vcmask 31744
        %v226 = vsel %vm224, %v207, 0
        %v229 = vsel %vm224, %v208, 0
        %vm231 = vcmask 1043456
        %v232 = vsel %vm231, %v221, 0
        %v234 = vsel %vm231, %v223, 0
        %236 = vmatprep.subr.mxu0 %v234
        %237 = vmatpush1.msra.mxu0 %v232
        %238 = vmatprep.subr.mxu0 0.0
        %239 = vmatpush1.msra.mxu0 0.0
        %240 = vmatprep.subr.mxu0 0.0
        %241 = vmatpush1.msra.mxu0 0.0
        %242 = vmatprep.subr.mxu0 0.0
        %243 = vmatpush1.msra.mxu0 0.0
        %244 = vmatprep.subr.mxu0 0.0
        %245 = vmatpush1.msra.mxu0 0.0
        %246 = vmatprep.subr.mxu0 0.0
        %247 = vmatpush1.msra.mxu0 0.0
        %248 = vmatprep.subr.mxu0 0.0
        %249 = vmatpush1.msra.mxu0 0.0
        %250 = vmatprep.subr.mxu0 0.0
        %251 = vmatpush1.msra.mxu0 0.0
        %252 = vmatprep.subr.mxu0 0.0
        %253 = vmatpush1.msra.mxu0 0.0
        %254 = vmatprep.subr.mxu0 0.0
        %255 = vmatpush1.msra.mxu0 0.0
        %256 = vmatprep.subr.mxu0 0.0
        %257 = vmatpush1.msra.mxu0 0.0
        %258 = vmatprep.subr.mxu0 0.0
        %259 = vmatpush1.msra.mxu0 0.0
        %260 = vmatprep.subr.mxu0 0.0
        %261 = vmatpush1.msra.mxu0 0.0
        %262 = vmatprep.subr.mxu0 0.0
        %263 = vmatpush1.msra.mxu0 0.0
        %264 = vmatprep.subr.mxu0 0.0
        %265 = vmatpush1.msra.mxu0 0.0
        %266 = vmatprep.subr.mxu0 0.0
        %267 = vmatpush1.msra.mxu0 0.0
        %268 = vmatprep.subr.mxu0 0.0
        %269 = vmatpush1.msra.mxu0 0.0
        %270 = vmatprep.subr.mxu0 0.0
        %271 = vmatpush1.msra.mxu0 0.0
        %272 = vmatprep.subr.mxu0 0.0
        %273 = vmatpush1.msra.mxu0 0.0
        %274 = vmatprep.subr.mxu0 0.0
        %275 = vmatpush1.msra.mxu0 0.0
        %276 = vmatprep.subr.mxu0 0.0
        %277 = vmatpush1.msra.mxu0 0.0
        %278 = vmatprep.subr.mxu0 0.0
        %279 = vmatpush1.msra.mxu0 0.0
        %280 = vmatprep.subr.mxu0 0.0
        %281 = vmatpush1.msra.mxu0 0.0
        %282 = vmatprep.subr.mxu0 0.0
        %283 = vmatpush1.msra.mxu0 0.0
        %284 = vmatprep.subr.mxu0 0.0
        %285 = vmatpush1.msra.mxu0 0.0
        %286 = vmatprep.subr.mxu0 0.0
        %287 = vmatpush1.msra.mxu0 0.0
        %288 = vmatprep.subr.mxu0 0.0
        %289 = vmatpush1.msra.mxu0 0.0
        %290 = vmatprep.subr.mxu0 0.0
        %291 = vmatpush1.msra.mxu0 0.0
        %292 = vmatprep.subr.mxu0 0.0
        %293 = vmatpush1.msra.mxu0 0.0
        %294 = vmatprep.subr.mxu0 0.0
        %295 = vmatpush1.msra.mxu0 0.0
        %296 = vmatprep.subr.mxu0 0.0
        %297 = vmatpush1.msra.mxu0 0.0
        %298 = vmatprep.subr.mxu0 0.0
        %299 = vmatpush1.msra.mxu0 0.0
        %300 = vmatprep.mubr.f32.mxu0 0.0
        %301 = vmatmul.mubr.f32.gmra.mrb[0].mxu0 %v226
        %v302 = vpop.f32.mrb[0].mxu0
        %v303 = vadd.f32 %v214, %v302
        %v304 = vpop.f32.mrb[0].mxu0
        %v305 = vadd.f32 %v214, %v304
        %306 = vmatprep.mubr.f32.mxu0 0.0
        %307 = vmatmul.mubr.f32.gmra.mrb[0].mxu0 %v229
        %v308 = vpop.f32.mrb[0].mxu0
        %v309 = vadd.f32 %v219, %v308
        %v310 = vpop.f32.mrb[0].mxu0
        %v311 = vadd.f32 %v219, %v310
        %312 = vdwg.mxu0
        %313 = vst [vmem:[%s194] sm:$0xff] %v303
        %314 = vst [vmem:[%s194 + $0x8] sm:$0xff] %v305
        %v317 = vcombine.low %v309, %v311
        %319 = vst [vmem:[%s201] sm:$0xff] %v317
        %s320 = sand.u32 %s98, 1
        %s321 = scalar_lea.sflag [#allocation3], %s320
        %s322 = sand.u32 %s98, 1
        %s323 = smul.addr %s322, 16
        %s324 = scalar_lea.vmem [#allocation2], %s323
        %s325 = sand.u32 %s124, 1
        %s326 = scalar_lea.sflag [#allocation5], %s325
        %s327 = sand.u32 %s124, 1
        %s328 = smul.addr %s327, 8
        %s329 = scalar_lea.vmem [#allocation4], %s328
        // Predicated region
        $region33: #{tpu_custom_call.1} parent=31 // pred_check
          %p330 = pneg %p108
        $region34: #{tpu_custom_call.1} parent=31 // pred_check_branch
          %332 = sbr.rel (%p330) target = $region36
        $region35: #{tpu_custom_call.1} parent=31 // pred_region
          %s334 = ssub.s32 256, 256
          %335 = vsyncadd %s321, %s334
          %s336 = smul.addr %s22, 2
          %s337 = smul.addr %s336, 128
          %s338 = scalar_lea.hbm %s3, %s337
          %s340 = sshll.u32 %s324, 4
          %s341 = int_to_ptr.vmem [resolvable:$true] %s340
          %343 = dma.vmem_to_hbm [thread:$0]  %s341, 256, %s338, %s321
        $region36: #{tpu_custom_call.1} parent=31 // pred_fallthru
          _
        // Predicated region
        $region37: #{tpu_custom_call.1} parent=31 // pred_check
          %p344 = pneg %p134
        $region38: #{tpu_custom_call.1} parent=31 // pred_check_branch
          %346 = sbr.rel (%p344) target = $region40
        $region39: #{tpu_custom_call.1} parent=31 // pred_region
          %s348 = ssub.s32 128, 128
          %349 = vsyncadd %s326, %s348
          %s350 = smul.addr %s22, 2
          %s351 = smul.addr %s350, 64
          %s352 = scalar_lea.hbm %s4, %s351
          %s354 = sshll.u32 %s329, 4
          %s355 = int_to_ptr.vmem [resolvable:$true] %s354
          %357 = dma.vmem_to_hbm [thread:$0]  %s355, 128, %s352, %s326
        $region40: #{tpu_custom_call.1} parent=31 // pred_fallthru
          _
      $region32: #{tpu_custom_call.1} parent=5 // pred_fallthru
        _
      %p358 = scmp.le.s32.totalorder 2, %s17
      // Predicated region
      $region41: #{tpu_custom_call.1} parent=5 // pred_check
        %p359 = pneg %p358
      $region42: #{tpu_custom_call.1} parent=5 // pred_check_branch
        %361 = sbr.rel (%p359) target = $region44
      $region43: #{tpu_custom_call.1} parent=5 // pred_region
        %s362 = ssub.s32 %s17, 2
        // Predicated region
        $region45: #{tpu_custom_call.1} parent=43 // pred_check
          %p363 = pneg %p114
        $region46: #{tpu_custom_call.1} parent=43 // pred_check_branch
          %365 = sbr.rel (%p363) target = $region48
        $region47: #{tpu_custom_call.1} parent=43 // pred_region
          %s366 = sand.u32 %s99, 1
          %s367 = scalar_lea.sflag [#allocation3], %s366
          %s368 = sand.u32 %s99, 1
          %s369 = smul.addr %s368, 16
          %s370 = scalar_lea.vmem [#allocation2], %s369
          %371 = dma.done %s367, 256
        $region48: #{tpu_custom_call.1} parent=43 // pred_fallthru
          _
        // Predicated region
        $region49: #{tpu_custom_call.1} parent=43 // pred_check
          %p372 = pneg %p140
        $region50: #{tpu_custom_call.1} parent=43 // pred_check_branch
          %374 = sbr.rel (%p372) target = $region52
        $region51: #{tpu_custom_call.1} parent=43 // pred_region
          %s375 = sand.u32 %s125, 1
          %s376 = scalar_lea.sflag [#allocation5], %s375
          %s377 = sand.u32 %s125, 1
          %s378 = smul.addr %s377, 8
          %s379 = scalar_lea.vmem [#allocation4], %s378
          %380 = dma.done %s376, 128
        $region52: #{tpu_custom_call.1} parent=43 // pred_fallthru
          _
      $region44: #{tpu_custom_call.1} parent=5 // pred_fallthru
        _
    $region6: #{tpu_custom_call.1} parent=1 // loop_footer
      %s21 = sadd.s32 1, %s17
    $region7: #{tpu_custom_call.1} parent=1 // loop_footer_branch
      %16 = sbr.rel target = $region3
    $region8: #{tpu_custom_call.1} parent=1 // loop_exit
      _
    %381 = vsyncpa [#allocation3], 1
    %s382 = scalar_lea.sflag [#allocation3], 1
    %383 = vsyncpa %s382, 1
    %384 = vsyncpa [#allocation5], 1
    %s385 = scalar_lea.sflag [#allocation5], 1
    %386 = vsyncpa %s385, 1

</llo_original>
